<compile_context>
chip_gen: v6e
topology: v6e:2x2x1
jax: 0.10.0
libtpu: 0.0.40
codegen_flags: <defaults>
</compile_context>

<pallas_src>
import functools

import jax
import jax.numpy as jnp
from jax import lax
from jax.experimental import pallas as pl
from jax.experimental.pallas import tpu as pltpu

EPS = 1e-5


def _conv_bn_relu_kernel(x_hbm, wc_ref, ws_ref, p_ref, m_ref, o_ref,
                         stack_ref, copy_sem, *,
                         ksize, cpad, bw_true, bw_pad, mm_dtype):
    l = pl.program_id(0)
    pad = (ksize - 1) // 2
    n_pad = bw_pad - bw_true          # static python int

    # Layer 0: pull the external input straight from HBM into the resident
    # output block (no dedicated auto-pipelined input buffer).
    @pl.when(l == 0)
    def _():
        cp = pltpu.make_async_copy(x_hbm, o_ref, copy_sem)
        cp.start()
        cp.wait()

    cur = o_ref[...].astype(jnp.float32)          # (C_pad, BWp) activation

    # Side taps stacked along the contraction axis (center tap handled by a
    # direct matmul against `cur`, so it never hits the scratch).  Each row
    # block starts on a sublane-tile boundary (cpad is tile-aligned).
    idx = 0
    for t in range(ksize):                        # static loop over taps
        s = t - pad
        if s == 0:
            continue
        rolled = pltpu.roll(cur, shift=(-s) % bw_pad, axis=1)
        stack_ref[pl.ds(idx * cpad, cpad), :] = (
            rolled * m_ref[t]).astype(stack_ref.dtype)
        idx += 1

    # Conv1d as center matmul + stacked side matmul (f32 accumulation on MXU).
    y = jnp.dot(wc_ref[0], cur.astype(mm_dtype),
                preferred_element_type=jnp.float32)
    if ksize > 1:
        y = y + jnp.dot(ws_ref[0], stack_ref[...],
                        preferred_element_type=jnp.float32)

    # BatchNorm1d (training mode), two-pass stats + folded affine.
    inv_n = 1.0 / bw_true
    mean = jnp.sum(y, axis=1, keepdims=True) * inv_n
    centered = y - mean
    ss = jnp.sum(centered * centered, axis=1, keepdims=True)
    if n_pad:
        # padded lanes carry y == 0 exactly -> centered == -mean there.
        ss = ss - float(n_pad) * (mean * mean)
    var = jnp.maximum(ss * inv_n, 0.0)
    scale = p_ref[0, 0] * lax.rsqrt(var + EPS)    # gamma / sqrt(var + eps)
    shift = p_ref[0, 1] - scale * mean            # beta - scale*mean (bias folded away)
    out = jnp.maximum(y * scale + shift, 0.0)
    if n_pad:
        out = out * m_ref[pad]                    # re-zero padded lanes for next layer
    o_ref[...] = out.astype(o_ref.dtype)


def conv_projection_1d(x, weights, biases, gammas, betas, *,
                       matmul_dtype=jnp.bfloat16):
    """x: (B, C, W) float32 (PyTorch NCW). Returns (B, C, W).

    matmul_dtype: bfloat16 (default) is the native MXU path on v5e/v6e/v7x
    (f32 accumulation).  Use jnp.float32 for tight-tolerance verification.
    """
    B, C, W = x.shape
    L, Cout, Cin, K = weights.shape
    assert Cout == C and Cin == C
    assert K % 2 == 1, "only odd kernel sizes reproduce PyTorch 'same' padding"
    del biases  # cancels exactly under training-mode BN mean subtraction

    pad = (K - 1) // 2
    nside = K - 1
    mm_bytes = jnp.dtype(matmul_dtype).itemsize
    sub = 8 * max(1, 4 // mm_bytes)               # sublane tile: 8 (f32) / 16 (bf16)
    C_pad = -(-C // sub) * sub
    BW = B * W
    BW_pad = -(-BW // 128) * 128                  # lane-dense (128 lanes)
    stack_rows = max(nside, 1) * C_pad

    # ---- host-side layout prep (zero padded) -------------------------------
    x_cb = jnp.transpose(x, (1, 0, 2)).reshape(C, BW)
    x_cb = jnp.pad(x_cb, ((0, C_pad - C), (0, BW_pad - BW)))

    w = jnp.pad(weights, ((0, 0), (0, C_pad - C), (0, C_pad - C), (0, 0)))
    w_k = jnp.transpose(w, (0, 3, 1, 2))                      # (L, K, Cp, Cp)
    w_center = w_k[:, pad].astype(matmul_dtype)               # (L, Cp, Cp)
    if nside:
        w_sides = jnp.concatenate(
            [w_k[:, t] for t in range(K) if t != pad],
            axis=2).astype(matmul_dtype)                      # (L, Cp, (K-1)*Cp)
    else:
        w_sides = jnp.zeros((L, C_pad, C_pad), matmul_dtype)  # unused dummy

    # gamma/beta packed into one per-layer parameter block (padded gammas = 0
    # so padded channels stay identically zero).
    params = jnp.stack([jnp.pad(gammas, ((0, 0), (0, C_pad - C))),
                        jnp.pad(betas, ((0, 0), (0, C_pad - C)))], axis=1)
    params = params.reshape(L, 2, C_pad, 1).astype(jnp.float32)

    # Per-tap masks: conv zero-padding at sample boundaries AND lane padding.
    lane = jnp.arange(BW_pad, dtype=jnp.int32)
    pos = lane % W
    lane_valid = lane < BW
    offs = jnp.arange(K, dtype=jnp.int32) - pad
    src = pos[None, :] + offs[:, None]
    valid = (src >= 0) & (src < W) & lane_valid[None, :]
    masks = valid.astype(jnp.float32).reshape(K, 1, BW_pad)

    # ---- VMEM budget (generation-aware) ------------------------------------
    try:
        vmem_cap = int(pltpu.get_tpu_info().vmem_capacity_bytes)
    except Exception:
        vmem_cap = 64 << 20                       # conservative (v7x per-core)
    est = (2 * C_pad * BW_pad * 4                          # resident output block
           + 5 * C_pad * BW_pad * 4                        # live f32 temporaries
           + stack_rows * BW_pad * mm_bytes                # stacked side-tap scratch
           + 2 * (C_pad * C_pad + C_pad * stack_rows) * mm_bytes  # dbl-buf weights
           + K * BW_pad * 4 + 4 * C_pad * 4                # masks + params
           + (4 << 20))                                    # headroom
    vmem_limit = int(min(max(est, 32 << 20), int(0.75 * vmem_cap)))

    kernel = functools.partial(_conv_bn_relu_kernel, ksize=K, cpad=C_pad,
                               bw_true=BW, bw_pad=BW_pad, mm_dtype=matmul_dtype)

    out_cb = pl.pallas_call(
        kernel,
        out_shape=jax.ShapeDtypeStruct((C_pad, BW_pad), jnp.float32),
        grid_spec=pltpu.PrefetchScalarGridSpec(
            num_scalar_prefetch=0,
            grid=(L,),
            in_specs=[
                pl.BlockSpec(memory_space=pl.ANY),                         # x (HBM)
                pl.BlockSpec((1, C_pad, C_pad), lambda l: (l, 0, 0)),      # center tap W
                pl.BlockSpec((1, C_pad, stack_rows), lambda l: (l, 0, 0)), # side tap W
                pl.BlockSpec((1, 2, C_pad, 1), lambda l: (l, 0, 0, 0)),    # gamma/beta
                pl.BlockSpec((K, 1, BW_pad), lambda l: (0, 0, 0)),         # tap masks
            ],
            out_specs=pl.BlockSpec((C_pad, BW_pad), lambda l: (0, 0)),
            scratch_shapes=[
                pltpu.VMEM((stack_rows, BW_pad), matmul_dtype),            # side-tap stack
                pltpu.SemaphoreType.DMA(()),                               # x copy sem
            ],
        ),
        compiler_params=pltpu.CompilerParams(
            dimension_semantics=("arbitrary",),
            vmem_limit_bytes=vmem_limit),
    )(x_cb, w_center, w_sides, params, masks)

    out = out_cb[:C, :BW].reshape(C, B, W)
    return jnp.transpose(out, (1, 0, 2)).astype(x.dtype)


def _reference(x, weights, biases, gammas, betas):
    """Pure-JAX reference matching the PyTorch forward (includes conv bias)."""
    L, _, _, K = weights.shape
    pad = (K - 1) // 2
    for l in range(L):
        y = lax.conv_general_dilated(
            x, weights[l], window_strides=(1,), padding=((pad, pad),),
            dimension_numbers=("NCH", "OIH", "NCH"))
        y = y + biases[l][None, :, None]
        mean = jnp.mean(y, axis=(0, 2), keepdims=True)
        var = jnp.mean((y - mean) ** 2, axis=(0, 2), keepdims=True)
        y = (y - mean) * lax.rsqrt(var + EPS)
        y = gammas[l][None, :, None] * y + betas[l][None, :, None]
        x = jnp.maximum(y, 0.0)
    return x


if __name__ == "__main__":
    B, C, W, L, K = 2, 8, 16, 2, 3

    key = jax.random.PRNGKey(0)
    kx, kw, kb, kg, kbt = jax.random.split(key, 5)
    x = jax.random.normal(kx, (B, C, W), dtype=jnp.float32)
    weights = 0.1 * jax.random.normal(kw, (L, C, C, K), dtype=jnp.float32)
    biases = 0.1 * jax.random.normal(kb, (L, C), dtype=jnp.float32)
    gammas = 1.0 + 0.1 * jax.random.normal(kg, (L, C), dtype=jnp.float32)
    betas = 0.1 * jax.random.normal(kbt, (L, C), dtype=jnp.float32)

    ref = _reference(x, weights, biases, gammas, betas)

    # f32 MXU path: must match the PyTorch forward to tight tolerance.
    out_f32 = conv_projection_1d(x, weights, biases, gammas, betas,
                                 matmul_dtype=jnp.float32)
    out_f32 = jax.block_until_ready(out_f32)
    assert out_f32.shape == (B, C, W)
    err_f32 = float(jnp.max(jnp.abs(out_f32 - ref)))
    assert jnp.allclose(out_f32, ref, atol=1e-4, rtol=1e-4), err_f32

    # default bf16 MXU path (production): f32 accumulation, looser tolerance.
    out_bf16 = conv_projection_1d(x, weights, biases, gammas, betas)
    out_bf16 = jax.block_until_ready(out_bf16)
    assert out_bf16.shape == (B, C, W)
    err_bf16 = float(jnp.max(jnp.abs(out_bf16 - ref)))
    assert jnp.allclose(out_bf16, ref, atol=1e-1, rtol=1e-1), err_bf16

    print("KERNEL_OK")
</pallas_src>

<mosaic_0001>
module attributes {stable_mosaic.version = 11 : i64} {
  func.func @_conv_bn_relu_kernel(%arg0: i32, %arg1: memref<8x128xf32, #tpu.memory_space<any>>, %arg2: memref<1x8x8xf32, #tpu.memory_space<vmem>>, %arg3: memref<1x8x16xf32, #tpu.memory_space<vmem>>, %arg4: memref<1x2x8x1xf32, #tpu.memory_space<vmem>>, %arg5: memref<3x1x128xf32, #tpu.memory_space<vmem>>, %arg6: memref<8x128xf32, #tpu.memory_space<vmem>>, %arg7: memref<16x128xf32, #tpu.memory_space<vmem>>, %arg8: memref<!tpu.dma_semaphore, #tpu.memory_space<semaphore_mem>>) attributes {dimension_semantics = [#tpu.dimension_semantics<arbitrary>], iteration_bounds = array<i64: 2>, scalar_prefetch = 0 : i64, scratch_operands = 2 : i64, tpu.core_type = #tpu.core_type<tc>, window_params = [{}, {transform_indices = @transform_1, window_bounds = array<i64: 1, 8, 8>}, {transform_indices = @transform_2, window_bounds = array<i64: 1, 8, 16>}, {transform_indices = @transform_3, window_bounds = array<i64: 1, 2, 8, 1>}, {pipeline_mode = #tpu.pipeline_mode<synchronous>, transform_indices = @transform_4, window_bounds = array<i64: 3, 1, 128>}, {pipeline_mode = #tpu.pipeline_mode<synchronous>, transform_indices = @transform_5, window_bounds = array<i64: 8, 128>}]} {
    %c0_i32 = arith.constant 0 : i32
    %0 = arith.cmpi eq, %arg0, %c0_i32 : i32
    %1 = arith.extui %0 : i1 to i32
    %c0_i32_0 = arith.constant 0 : i32
    %2 = arith.cmpi ne, %1, %c0_i32_0 : i32
    scf.if %2 {
      tpu.enqueue_dma source(%arg1 : memref<8x128xf32, #tpu.memory_space<any>>) target(%arg6 : memref<8x128xf32, #tpu.memory_space<vmem>>) target_semaphore(%arg8 : memref<!tpu.dma_semaphore, #tpu.memory_space<semaphore_mem>>)
      tpu.wait_dma2 semaphore(%arg8 : memref<!tpu.dma_semaphore, #tpu.memory_space<semaphore_mem>>) src(%arg1 : memref<8x128xf32, #tpu.memory_space<any>>) dst(%arg6 : memref<8x128xf32, #tpu.memory_space<vmem>>)
    } else {
    }
    %c0 = arith.constant 0 : index
    %c0_1 = arith.constant 0 : index
    %3 = vector.load %arg6[%c0, %c0_1] : memref<8x128xf32, #tpu.memory_space<vmem>>, vector<8x128xf32>
    %c1_i32 = arith.constant 1 : i32
    %4 = tpu.dynamic_rotate %3 by %c1_i32 dim 1 : vector<8x128xf32>, i32 -> vector<8x128xf32>
    %c0_2 = arith.constant 0 : index
    %c0_3 = arith.constant 0 : index
    %c0_4 = arith.constant 0 : index
    %5 = vector.load %arg5[%c0_2, %c0_3, %c0_4] : memref<3x1x128xf32, #tpu.memory_space<vmem>>, vector<1x1x128xf32>
    %6 = vector.shape_cast %5 : vector<1x1x128xf32> to vector<1x128xf32>
    %7 = vector.broadcast %6 : vector<1x128xf32> to vector<8x128xf32>
    %8 = arith.mulf %4, %7 : vector<8x128xf32>
    %c0_5 = arith.constant 0 : index
    %c0_6 = arith.constant 0 : index
    %9 = vector.load %arg7[%c0_5, %c0_6] : memref<16x128xf32, #tpu.memory_space<vmem>>, vector<8x128xf32>
    tpu.vector_store %arg7[%c0_5, %c0_6], %8 {strides = array<i32>} : memref<16x128xf32, #tpu.memory_space<vmem>>, vector<8x128xf32>,
    %c127_i32 = arith.constant 127 : i32
    %10 = tpu.dynamic_rotate %3 by %c127_i32 dim 1 : vector<8x128xf32>, i32 -> vector<8x128xf32>
    %c2 = arith.constant 2 : index
    %c0_7 = arith.constant 0 : index
    %c0_8 = arith.constant 0 : index
    %11 = vector.load %arg5[%c2, %c0_7, %c0_8] : memref<3x1x128xf32, #tpu.memory_space<vmem>>, vector<1x1x128xf32>
    %12 = vector.shape_cast %11 : vector<1x1x128xf32> to vector<1x128xf32>
    %13 = vector.broadcast %12 : vector<1x128xf32> to vector<8x128xf32>
    %14 = arith.mulf %10, %13 : vector<8x128xf32>
    %c8 = arith.constant 8 : index
    %c0_9 = arith.constant 0 : index
    %15 = vector.load %arg7[%c8, %c0_9] : memref<16x128xf32, #tpu.memory_space<vmem>>, vector<8x128xf32>
    tpu.vector_store %arg7[%c8, %c0_9], %14 {strides = array<i32>} : memref<16x128xf32, #tpu.memory_space<vmem>>, vector<8x128xf32>,
    %c0_10 = arith.constant 0 : index
    %c0_11 = arith.constant 0 : index
    %c0_12 = arith.constant 0 : index
    %16 = vector.load %arg2[%c0_10, %c0_11, %c0_12] : memref<1x8x8xf32, #tpu.memory_space<vmem>>, vector<1x8x8xf32>
    %17 = vector.shape_cast %16 : vector<1x8x8xf32> to vector<8x8xf32>
    %cst = arith.constant dense<0.000000e+00> : vector<8x128xf32>
    %18 = tpu.matmul %17, %3, %cst {dimension_numbers = #tpu.dot_dimension_numbers<[1], [0], [0], [1], [0, 0, 1, 1], [], []>} : vector<8x8xf32>, vector<8x128xf32>, vector<8x128xf32> -> vector<8x128xf32>
    %c0_13 = arith.constant 0 : index
    %c0_14 = arith.constant 0 : index
    %c0_15 = arith.constant 0 : index
    %19 = vector.load %arg3[%c0_13, %c0_14, %c0_15] : memref<1x8x16xf32, #tpu.memory_space<vmem>>, vector<1x8x16xf32>
    %20 = vector.shape_cast %19 : vector<1x8x16xf32> to vector<8x16xf32>
    %c0_16 = arith.constant 0 : index
    %c0_17 = arith.constant 0 : index
    %21 = vector.load %arg7[%c0_16, %c0_17] : memref<16x128xf32, #tpu.memory_space<vmem>>, vector<16x128xf32>
    %cst_18 = arith.constant dense<0.000000e+00> : vector<8x128xf32>
    %22 = tpu.matmul %20, %21, %cst_18 {dimension_numbers = #tpu.dot_dimension_numbers<[1], [0], [0], [1], [0, 0, 1, 1], [], []>} : vector<8x16xf32>, vector<16x128xf32>, vector<8x128xf32> -> vector<8x128xf32>
    %23 = arith.addf %18, %22 : vector<8x128xf32>
    %cst_19 = arith.constant dense<0.000000e+00> : vector<8xf32>
    %24 = vector.multi_reduction <add>, %23, %cst_19 [1] : vector<8x128xf32> to vector<8xf32>
    %25 = vector.shape_cast %24 : vector<8xf32> to vector<8x1xf32>
    %cst_20 = arith.constant 3.125000e-02 : f32
    %26 = vector.broadcast %cst_20 : f32 to vector<8x1xf32>
    %27 = arith.mulf %25, %26 : vector<8x1xf32>
    %28 = vector.broadcast %27 : vector<8x1xf32> to vector<8x128xf32>
    %29 = arith.subf %23, %28 : vector<8x128xf32>
    %30 = arith.mulf %29, %29 : vector<8x128xf32>
    %cst_21 = arith.constant dense<0.000000e+00> : vector<8xf32>
    %31 = vector.multi_reduction <add>, %30, %cst_21 [1] : vector<8x128xf32> to vector<8xf32>
    %32 = vector.shape_cast %31 : vector<8xf32> to vector<8x1xf32>
    %33 = arith.mulf %27, %27 : vector<8x1xf32>
    %cst_22 = arith.constant 9.600000e+01 : f32
    %34 = vector.broadcast %cst_22 : f32 to vector<8x1xf32>
    %35 = arith.mulf %34, %33 : vector<8x1xf32>
    %36 = arith.subf %32, %35 : vector<8x1xf32>
    %cst_23 = arith.constant 3.125000e-02 : f32
    %37 = vector.broadcast %cst_23 : f32 to vector<8x1xf32>
    %38 = arith.mulf %36, %37 : vector<8x1xf32>
    %cst_24 = arith.constant 0.000000e+00 : f32
    %39 = vector.broadcast %cst_24 : f32 to vector<8x1xf32>
    %40 = arith.maximumf %38, %39 : vector<8x1xf32>
    %c0_25 = arith.constant 0 : index
    %c0_26 = arith.constant 0 : index
    %c0_27 = arith.constant 0 : index
    %c0_28 = arith.constant 0 : index
    %41 = vector.load %arg4[%c0_25, %c0_26, %c0_27, %c0_28] : memref<1x2x8x1xf32, #tpu.memory_space<vmem>>, vector<1x1x8x1xf32>
    %42 = vector.shape_cast %41 : vector<1x1x8x1xf32> to vector<8x1xf32>
    %cst_29 = arith.constant 9.99999974E-6 : f32
    %43 = vector.broadcast %cst_29 : f32 to vector<8x1xf32>
    %44 = arith.addf %40, %43 : vector<8x1xf32>
    %45 = math.rsqrt %44 : vector<8x1xf32>
    %46 = arith.mulf %42, %45 : vector<8x1xf32>
    %c0_30 = arith.constant 0 : index
    %c1 = arith.constant 1 : index
    %c0_31 = arith.constant 0 : index
    %c0_32 = arith.constant 0 : index
    %47 = vector.load %arg4[%c0_30, %c1, %c0_31, %c0_32] : memref<1x2x8x1xf32, #tpu.memory_space<vmem>>, vector<1x1x8x1xf32>
    %48 = vector.shape_cast %47 : vector<1x1x8x1xf32> to vector<8x1xf32>
    %49 = arith.mulf %46, %27 : vector<8x1xf32>
    %50 = arith.subf %48, %49 : vector<8x1xf32>
    %51 = vector.broadcast %46 : vector<8x1xf32> to vector<8x128xf32>
    %52 = arith.mulf %23, %51 : vector<8x128xf32>
    %53 = vector.broadcast %50 : vector<8x1xf32> to vector<8x128xf32>
    %54 = arith.addf %52, %53 : vector<8x128xf32>
    %cst_33 = arith.constant 0.000000e+00 : f32
    %55 = vector.broadcast %cst_33 : f32 to vector<8x128xf32>
    %56 = arith.maximumf %54, %55 : vector<8x128xf32>
    %c1_34 = arith.constant 1 : index
    %c0_35 = arith.constant 0 : index
    %c0_36 = arith.constant 0 : index
    %57 = vector.load %arg5[%c1_34, %c0_35, %c0_36] : memref<3x1x128xf32, #tpu.memory_space<vmem>>, vector<1x1x128xf32>
    %58 = vector.shape_cast %57 : vector<1x1x128xf32> to vector<1x128xf32>
    %59 = vector.broadcast %58 : vector<1x128xf32> to vector<8x128xf32>
    %60 = arith.mulf %56, %59 : vector<8x128xf32>
    %c0_37 = arith.constant 0 : index
    %c0_38 = arith.constant 0 : index
    %61 = vector.load %arg6[%c0_37, %c0_38] : memref<8x128xf32, #tpu.memory_space<vmem>>, vector<8x128xf32>
    tpu.vector_store %arg6[%c0_37, %c0_38], %60 {strides = array<i32>} : memref<8x128xf32, #tpu.memory_space<vmem>>, vector<8x128xf32>,
    return
  }
  func.func @transform_1(%arg0: i32) -> (i32, i32, i32) {
    %c0_i32 = arith.constant 0 : i32
    %c0_i32_0 = arith.constant 0 : i32
    %c0_i32_1 = arith.constant 0 : i32
    return %arg0, %c0_i32, %c0_i32_0 : i32, i32, i32
  }
  func.func @transform_2(%arg0: i32) -> (i32, i32, i32) {
    %c0_i32 = arith.constant 0 : i32
    %c0_i32_0 = arith.constant 0 : i32
    %c0_i32_1 = arith.constant 0 : i32
    return %arg0, %c0_i32, %c0_i32_0 : i32, i32, i32
  }
  func.func @transform_3(%arg0: i32) -> (i32, i32, i32, i32) {
    %c0_i32 = arith.constant 0 : i32
    %c0_i32_0 = arith.constant 0 : i32
    %c0_i32_1 = arith.constant 0 : i32
    %c0_i32_2 = arith.constant 0 : i32
    return %arg0, %c0_i32, %c0_i32_0, %c0_i32_1 : i32, i32, i32, i32
  }
  func.func @transform_4(%arg0: i32) -> (i32, i32, i32) {
    %c0_i32 = arith.constant 0 : i32
    %c0_i32_0 = arith.constant 0 : i32
    %c0_i32_1 = arith.constant 0 : i32
    %c0_i32_2 = arith.constant 0 : i32
    return %c0_i32, %c0_i32_0, %c0_i32_1 : i32, i32, i32
  }
  func.func @transform_5(%arg0: i32) -> (i32, i32) {
    %c0_i32 = arith.constant 0 : i32
    %c0_i32_0 = arith.constant 0 : i32
    %c0_i32_1 = arith.constant 0 : i32
    return %c0_i32, %c0_i32_0 : i32, i32
  }
}

</mosaic_0001>

<llo_original>
// kernel: tpu_custom_call.1
$region0: #{tpu_custom_call.1}
  #allocation0 [shape = 'u32[]', space=smem, size = 0x4, offset = 0x4, fixed_abs, tag = 'smem constant byte address 0x4 - core index']
  #allocation1 [shape = 'u32[144,128]{1,0:T(1,128)}', space=vmem, size = 0x12000, scoped, tag = 'internal scratch']
  #allocation2 [shape = 'f32[16,128]{1,0:T(8,128)}', space=vmem, size = 0x2000, scoped, tag = 'scratch operand']
  #allocation3 [shape = 's32[1]{0}', space=sflag, size = 0x4, scoped, tag = 'scratch operand']
  #allocation6 [shape = 's32[]', space=sflag, size = 0x4, offset = 0, fixed_abs, tag = 'sflag constant byte address 0x0 - dummy sync flag']
  #allocation7 [shape = 's32[]', space=sflag, size = 0x4, offset = 0, fixed_abs, tag = 'sflag constant byte address 0x0 - dummy sync flag']
  #allocation8 [shape = 'u32[]', space=smem, size = 0x4, offset = 0x44, fixed_abs, tag = 'smem constant byte address 0x44 - assertion arg 0']
  #allocation9 [shape = 'u32[]', space=smem, size = 0x4, offset = 0x48, fixed_abs, tag = 'smem constant byte address 0x48 - assertion arg 1']
  %s0 = inlined_call_operand.hbm [shape: f32[8,128], index: 0, kind: input, shape index: {}]
  %s1 = inlined_call_operand.vmem [shape: f32[2,8,8], index: 1, kind: input, shape index: {}]
  %s2 = inlined_call_operand.vmem [shape: f32[2,8,16], index: 2, kind: input, shape index: {}]
  %s3 = inlined_call_operand.vmem [shape: f32[2,2,8,1], index: 3, kind: input, shape index: {}]
  %s4 = inlined_call_operand.vmem [shape: f32[3,1,128], index: 4, kind: input, shape index: {}]
  %s5 = inlined_call_operand.hbm [shape: f32[8,128], index: 5, kind: output, shape index: {}]
  %s6 = sld [smem:[#allocation0]]
  $region57: #{tpu_custom_call.1} parent=0
    _
  %s8 = ssub.s32 1, %s6
  %s9 = scalar_select 0, %s8, %s6
  $region1: #{tpu_custom_call.1} parent=0
    #allocation4 [shape = 'u8[4096]{0}', space=vmem, size = 0x1000, scoped, tag = 'output window, operand 0, single buffered']
    #allocation5 [shape = 's32[2]{0}', space=sflag, size = 0x8, scoped, tag = 'scoped memory for tpu_custom_call.1']
    %10 = vsyncpa [#allocation5], 0
    loop: start=0, step=1, limit=4
    $region2: #{tpu_custom_call.1} parent=1 // loop_pre_header
      _
    $region3: #{tpu_custom_call.1} parent=1 // loop_header
      %s12 = sphi 0, %s16
      %p13 = scmp.ge.s32.totalorder %s12, 4
      %s22 = sphi 0, %s24
      %s25 = sphi 0, %s22
      %s26 = sphi 0, %s25
      %s42 = sphi 0, %s26
      %s48 = sphi 0, %s50
      %s51 = sphi 0, %s48
      %s52 = sphi 0, %s51
      %s68 = sphi 0, %s52
      %s74 = sphi 0, %s76
      %s77 = sphi 0, %s74
      %s78 = sphi 0, %s77
      %s94 = sphi 0, %s78
      %s98 = sphi 0, %s98
      %s100 = sphi 0, %s98
      %s101 = sphi 0, %s100
      %s115 = sphi 0, %s101
      %s119 = sphi 0, %s119
      %s121 = sphi 0, %s119
      %s122 = sphi 0, %s121
      %s136 = sphi 0, %s122
    $region4: #{tpu_custom_call.1} parent=1 // loop_header_branch
      %15 = sbr.rel (%p13) target = $region8
    $region5: #{tpu_custom_call.1} parent=1 // loop_body
      %s17 = ssub.s32 %s12, 1
      %s18 = ssub.s32 %s12, 2
      %s19 = sadd.s32 %s12, 1
      %s20 = ssub.s32 %s12, %s19
      %p21 = scmp.eq.s32.totalorder %s20, 0
      %s23 = sadd.s32 %s22, 1
      %s24 = scalar_select %p21, %s22, %s23
      %p27 = pneg %p21
      %p28 = scmp.eq.s32.totalorder %s12, 1
      %p29 = por %p27, %p28
      %p30 = scmp.ne.s32.totalorder %s22, %s25
      %p31 = scmp.eq.s32.totalorder %s12, 0
      %p32 = por %p30, %p31
      %p33 = scmp.ne.s32.totalorder %s22, %s25
      %p34 = scmp.eq.s32.totalorder %s17, 1
      %p35 = por %p33, %p34
      %p36 = scmp.ne.s32.totalorder %s25, %s26
      %p37 = scmp.eq.s32.totalorder %s17, 0
      %p38 = por %p36, %p37
      %p39 = scmp.ne.s32.totalorder %s25, %s26
      %p40 = scmp.eq.s32.totalorder %s18, 1
      %p41 = por %p39, %p40
      %p43 = scmp.ne.s32.totalorder %s26, %s42
      %p44 = scmp.eq.s32.totalorder %s18, 0
      %p45 = por %p43, %p44
      %s46 = ssub.s32 %s12, %s19
      %p47 = scmp.eq.s32.totalorder %s46, 0
      %s49 = sadd.s32 %s48, 1
      %s50 = scalar_select %p47, %s48, %s49
      %p53 = pneg %p47
      %p54 = scmp.eq.s32.totalorder %s12, 1
      %p55 = por %p53, %p54
      %p56 = scmp.ne.s32.totalorder %s48, %s51
      %p57 = scmp.eq.s32.totalorder %s12, 0
      %p58 = por %p56, %p57
      %p59 = scmp.ne.s32.totalorder %s48, %s51
      %p60 = scmp.eq.s32.totalorder %s17, 1
      %p61 = por %p59, %p60
      %p62 = scmp.ne.s32.totalorder %s51, %s52
      %p63 = scmp.eq.s32.totalorder %s17, 0
      %p64 = por %p62, %p63
      %p65 = scmp.ne.s32.totalorder %s51, %s52
      %p66 = scmp.eq.s32.totalorder %s18, 1
      %p67 = por %p65, %p66
      %p69 = scmp.ne.s32.totalorder %s52, %s68
      %p70 = scmp.eq.s32.totalorder %s18, 0
      %p71 = por %p69, %p70
      %s72 = ssub.s32 %s12, %s19
      %p73 = scmp.eq.s32.totalorder %s72, 0
      %s75 = sadd.s32 %s74, 1
      %s76 = scalar_select %p73, %s74, %s75
      %p79 = pneg %p73
      %p80 = scmp.eq.s32.totalorder %s12, 1
      %p81 = por %p79, %p80
      %p82 = scmp.ne.s32.totalorder %s74, %s77
      %p83 = scmp.eq.s32.totalorder %s12, 0
      %p84 = por %p82, %p83
      %p85 = scmp.ne.s32.totalorder %s74, %s77
      %p86 = scmp.eq.s32.totalorder %s17, 1
      %p87 = por %p85, %p86
      %p88 = scmp.ne.s32.totalorder %s77, %s78
      %p89 = scmp.eq.s32.totalorder %s17, 0
      %p90 = por %p88, %p89
      %p91 = scmp.ne.s32.totalorder %s77, %s78
      %p92 = scmp.eq.s32.totalorder %s18, 1
      %p93 = por %p91, %p92
      %p95 = scmp.ne.s32.totalorder %s78, %s94
      %p96 = scmp.eq.s32.totalorder %s18, 0
      %p97 = por %p95, %p96
      %s99 = sadd.s32 %s98, 1
      %p102 = scmp.eq.s32.totalorder %s12, 1
      %p103 = scmp.ne.s32.totalorder %s98, %s100
      %p104 = scmp.eq.s32.totalorder %s12, 0
      %p105 = por %p103, %p104
      %p106 = scmp.ne.s32.totalorder %s98, %s100
      %p107 = scmp.eq.s32.totalorder %s17, 1
      %p108 = por %p106, %p107
      %p109 = scmp.ne.s32.totalorder %s100, %s101
      %p110 = scmp.eq.s32.totalorder %s17, 0
      %p111 = por %p109, %p110
      %p112 = scmp.ne.s32.totalorder %s100, %s101
      %p113 = scmp.eq.s32.totalorder %s18, 1
      %p114 = por %p112, %p113
      %p116 = scmp.ne.s32.totalorder %s101, %s115
      %p117 = scmp.eq.s32.totalorder %s18, 0
      %p118 = por %p116, %p117
      %s120 = sadd.s32 %s119, 1
      %p123 = scmp.eq.s32.totalorder %s12, 1
      %p124 = scmp.ne.s32.totalorder %s119, %s121
      %p125 = scmp.eq.s32.totalorder %s12, 0
      %p126 = por %p124, %p125
      %p127 = scmp.ne.s32.totalorder %s119, %s121
      %p128 = scmp.eq.s32.totalorder %s17, 1
      %p129 = por %p127, %p128
      %p130 = scmp.ne.s32.totalorder %s121, %s122
      %p131 = scmp.eq.s32.totalorder %s17, 0
      %p132 = por %p130, %p131
      %p133 = scmp.ne.s32.totalorder %s121, %s122
      %p134 = scmp.eq.s32.totalorder %s18, 1
      %p135 = por %p133, %p134
      %p137 = scmp.ne.s32.totalorder %s122, %s136
      %p138 = scmp.eq.s32.totalorder %s18, 0
      %p139 = por %p137, %p138
      %p140 = scmp.le.s32.totalorder 1, %s12
      %p141 = scmp.lt.s32.totalorder %s12, 3
      %p142 = pnand %p140, %p141
      %p143 = pneg %p142
      // Predicated region
      $region9: #{tpu_custom_call.1} parent=5 // pred_check
        _
      $region10: #{tpu_custom_call.1} parent=5 // pred_check_branch
        %145 = sbr.rel (%p142) target = $region12
      $region11: #{tpu_custom_call.1} parent=5 // pred_region
        %s146 = ssub.s32 %s12, 1
        // Predicated region
        $region13: #{tpu_custom_call.1} parent=11 // pred_check
          %p147 = pneg %p111
        $region14: #{tpu_custom_call.1} parent=11 // pred_check_branch
          %149 = sbr.rel (%p147) target = $region16
        $region15: #{tpu_custom_call.1} parent=11 // pred_region
          _
        $region16: #{tpu_custom_call.1} parent=11 // pred_fallthru
          _
      $region12: #{tpu_custom_call.1} parent=5 // pred_fallthru
        _
      %p150 = scmp.lt.s32.totalorder %s12, 2
      // Predicated region
      $region17: #{tpu_custom_call.1} parent=5 // pred_check
        %p151 = pneg %p150
      $region18: #{tpu_custom_call.1} parent=5 // pred_check_branch
        %153 = sbr.rel (%p151) target = $region20
      $region19: #{tpu_custom_call.1} parent=5 // pred_region
        // Predicated region
        $region21: #{tpu_custom_call.1} parent=19 // pred_check
          %p154 = pneg %p32
        $region22: #{tpu_custom_call.1} parent=19 // pred_check_branch
          %156 = sbr.rel (%p154) target = $region24
        $region23: #{tpu_custom_call.1} parent=19 // pred_region
          %p157 = scmp.lt.s32.totalorder %s12, 1
          %s158 = scalar_select %p157, %s12, 1
          %s159 = smul.addr %s158, 8
          %s160 = scalar_lea.vmem %s1, %s159
        $region24: #{tpu_custom_call.1} parent=19 // pred_fallthru
          _
        // Predicated region
        $region25: #{tpu_custom_call.1} parent=19 // pred_check
          %p161 = pneg %p58
        $region26: #{tpu_custom_call.1} parent=19 // pred_check_branch
          %163 = sbr.rel (%p161) target = $region28
        $region27: #{tpu_custom_call.1} parent=19 // pred_region
          %p164 = scmp.lt.s32.totalorder %s12, 1
          %s165 = scalar_select %p164, %s12, 1
          %s166 = smul.addr %s165, 8
          %s167 = scalar_lea.vmem %s2, %s166
        $region28: #{tpu_custom_call.1} parent=19 // pred_fallthru
          _
        // Predicated region
        $region29: #{tpu_custom_call.1} parent=19 // pred_check
          %p168 = pneg %p84
        $region30: #{tpu_custom_call.1} parent=19 // pred_check_branch
          %170 = sbr.rel (%p168) target = $region32
        $region31: #{tpu_custom_call.1} parent=19 // pred_region
          %p171 = scmp.lt.s32.totalorder %s12, 1
          %s172 = scalar_select %p171, %s12, 1
          %s173 = smul.addr %s172, 2
          %s174 = smul.addr %s173, 8
          %s175 = scalar_lea.vmem %s3, %s174
        $region32: #{tpu_custom_call.1} parent=19 // pred_fallthru
          _
      $region20: #{tpu_custom_call.1} parent=5 // pred_fallthru
        _
      %p176 = scmp.le.s32.totalorder 1, %s12
      %p177 = scmp.lt.s32.totalorder %s12, 3
      %p178 = pnand %p176, %p177
      %p179 = pneg %p178
      // Predicated region
      $region33: #{tpu_custom_call.1} parent=5 // pred_check
        _
      $region34: #{tpu_custom_call.1} parent=5 // pred_check_branch
        %181 = sbr.rel (%p178) target = $region36
      $region35: #{tpu_custom_call.1} parent=5 // pred_region
        %s182 = ssub.s32 %s12, 1
        %p183 = scmp.lt.s32.totalorder %s17, 1
        %s184 = scalar_select %p183, %s17, 1
        %s185 = smul.addr %s184, 8
        %s186 = scalar_lea.vmem %s1, %s185
        %p187 = pneg %p38
        %p188 = pneg %p35
        %p189 = scmp.lt.s32.totalorder %s17, 1
        %s190 = scalar_select %p189, %s17, 1
        %s191 = smul.addr %s190, 8
        %s192 = scalar_lea.vmem %s2, %s191
        %p193 = pneg %p64
        %p194 = pneg %p61
        %p195 = scmp.lt.s32.totalorder %s17, 1
        %s196 = scalar_select %p195, %s17, 1
        %s197 = smul.addr %s196, 2
        %s198 = smul.addr %s197, 8
        %s199 = scalar_lea.vmem %s3, %s198
        %p200 = pneg %p90
        %p201 = pneg %p87
        %p202 = pneg %p111
        %p203 = pneg %p108
        %p204 = pneg %p132
        %p205 = pneg %p129
        %p206 = scmp.lt.s32.totalorder %s17, 1
        %s207 = scalar_select %p206, %s17, 1
        %s208 = smul.addr %s207, 8
        %s209 = scalar_lea.vmem %s1, %s208
        %p210 = scmp.lt.s32.totalorder %s17, 1
        %s211 = scalar_select %p210, %s17, 1
        %s212 = smul.addr %s211, 8
        %s213 = scalar_lea.vmem %s2, %s212
        %p214 = scmp.lt.s32.totalorder %s17, 1
        %s215 = scalar_select %p214, %s17, 1
        %s216 = smul.addr %s215, 2
        %s217 = smul.addr %s216, 8
        %s218 = scalar_lea.vmem %s3, %s217
        %p219 = scmp.eq.s32.totalorder %s17, 0
        // Predicated region
        $region37: #{tpu_custom_call.1} parent=35 // pred_check
          %p220 = pneg %p219
        $region38: #{tpu_custom_call.1} parent=35 // pred_check_branch
          %222 = sbr.rel (%p220) target = $region40
        $region39: #{tpu_custom_call.1} parent=35 // pred_region
          // Predicated region
          $region41: #{tpu_custom_call.1} parent=39 // pred_check
            _
          $region42: #{tpu_custom_call.1} parent=39 // pred_check_branch
            %224 = sbr.rel target = $region44
          $region43: #{tpu_custom_call.1} parent=39 // pred_region
            %225 = sst [smem:[#allocation8]] [#allocation7]
            %226 = sst [smem:[#allocation9]] [#allocation6]
          $region44: #{tpu_custom_call.1} parent=39 // pred_fallthru
            _
          %228 = shalt.err (0)
          %s230 = sshll.u32 [#allocation4], 4
          %s231 = int_to_ptr.vmem [resolvable:$true] %s230
          %233 = dma.hbm_to_vmem [thread:$0]  %s0, 128, %s231, [#allocation3]
          %s234 = smul.u32 8, 1
          %s235 = sshll.u32 %s234, 4
          %236 = dma.done [#allocation3], %s235
        $region40: #{tpu_custom_call.1} parent=35 // pred_fallthru
          _
        %v237 = vld [vmem:[#allocation4] sm:$0xff]
        %238 = vrot.lane.b32.xlu0 %v237, 1
        %v239 = vpop.permute.xlu0 %238
        %v240 = vld [vmem:[%s4] sm:$0x1]
        %v242 = vlaneseq
        %v243 = vshrl.u32 %v242, 7
        %v244 = vsub.s32 0, %v243
        %v245 = vrot.slane %v240, %v244
        %v247 = vmul.f32 %v239, %v245
        %248 = vst [vmem:[#allocation2] sm:$0xff] %v247
        %249 = vrot.lane.b32.xlu0 %v237, 127
        %v250 = vpop.permute.xlu0 %249
        %s251 = scalar_lea.vmem %s4, 2
        %v252 = vld [vmem:[%s251] sm:$0x1]
        %v254 = vlaneseq
        %v255 = vshrl.u32 %v254, 7
        %v256 = vsub.s32 0, %v255
        %v257 = vrot.slane %v252, %v256
        %v259 = vmul.f32 %v250, %v257
        %260 = vst [vmem:[#allocation2 + $0x8] sm:$0xff] %v259
        %v261 = vld [vmem:[%s209] sm:$0xff]
        %v262 = vld [vmem:[%s213] sm:$0xff]
        %v263 = vld [vmem:[#allocation2] sm:$0xff]
        %v264 = vld [vmem:[#allocation2 + $0x8] sm:$0xff]
        %vm265 = vcmask 130048
        %v267 = vsel %vm265, %v262, 0
        %269 = vmatprep.subr.mxu0 0.0
        %270 = vmatpush1.msra.mxu0 0.0
        %271 = vmatprep.subr.mxu0 0.0
        %272 = vmatpush1.msra.mxu0 0.0
        %273 = vmatprep.subr.mxu0 0.0
        %274 = vmatpush1.msra.mxu0 0.0
        %275 = vmatprep.subr.mxu0 0.0
        %276 = vmatpush1.msra.mxu0 0.0
        %277 = vmatprep.subr.mxu0 0.0
        %278 = vmatpush1.msra.mxu0 0.0
        %279 = vmatprep.subr.mxu0 0.0
        %280 = vmatpush1.msra.mxu0 0.0
        %281 = vmatprep.subr.mxu0 0.0
        %282 = vmatpush1.msra.mxu0 0.0
        %283 = vmatprep.subr.mxu0 0.0
        %284 = vmatpush1.msra.mxu0 0.0
        %285 = vmatprep.subr.mxu0 0.0
        %286 = vmatpush1.msra.mxu0 0.0
        %287 = vmatprep.subr.mxu0 0.0
        %288 = vmatpush1.msra.mxu0 0.0
        %289 = vmatprep.subr.mxu0 0.0
        %290 = vmatpush1.msra.mxu0 0.0
        %291 = vmatprep.subr.mxu0 0.0
        %292 = vmatpush1.msra.mxu0 0.0
        %293 = vmatprep.subr.mxu0 0.0
        %294 = vmatpush1.msra.mxu0 0.0
        %295 = vmatprep.subr.mxu0 0.0
        %296 = vmatpush1.msra.mxu0 0.0
        %297 = vmatprep.subr.mxu0 0.0
        %298 = vmatpush1.msra.mxu0 %v264
        %299 = vmatprep.subr.mxu0 0.0
        %300 = vmatpush1.msra.mxu0 %v263
        %301 = vmatprep.subr.mxu0 0.0
        %302 = vmatpush2.msra.mxu0 0.0
        %303 = vmatprep.subr.mxu0 0.0
        %304 = vmatpush2.msra.mxu0 0.0
        %305 = vmatprep.subr.mxu0 0.0
        %306 = vmatpush2.msra.mxu0 0.0
        %307 = vmatprep.subr.mxu0 0.0
        %308 = vmatpush2.msra.mxu0 0.0
        %309 = vmatprep.subr.mxu0 0.0
        %310 = vmatpush2.msra.mxu0 0.0
        %311 = vmatprep.subr.mxu0 0.0
        %312 = vmatpush2.msra.mxu0 0.0
        %313 = vmatprep.subr.mxu0 0.0
        %314 = vmatpush2.msra.mxu0 0.0
        %315 = vmatprep.subr.mxu0 0.0
        %316 = vmatpush2.msra.mxu0 0.0
        %317 = vmatprep.subr.mxu0 0.0
        %318 = vmatpush2.msra.mxu0 0.0
        %319 = vmatprep.subr.mxu0 0.0
        %320 = vmatpush2.msra.mxu0 0.0
        %321 = vmatprep.subr.mxu0 0.0
        %322 = vmatpush2.msra.mxu0 0.0
        %323 = vmatprep.subr.mxu0 0.0
        %324 = vmatpush2.msra.mxu0 0.0
        %325 = vmatprep.subr.mxu0 0.0
        %326 = vmatpush2.msra.mxu0 0.0
        %327 = vmatprep.subr.mxu0 0.0
        %328 = vmatpush2.msra.mxu0 0.0
        %329 = vmatprep.subr.mxu0 0.0
        %330 = vmatpush2.msra.mxu0 0.0
        %331 = vmatprep.subr.mxu0 0.0
        %332 = vmatpush2.msra.mxu0 0.0
        %333 = vmatprep.mubr.f32.mxu0 0.0
        %334 = vmatmul.mubr.f32.gmra.mxu0 %v267
        %v335 = vpop.f32.mrf.mxu0
        %v336 = vadd.f32 0.0, %v335
        %v337 = vpop.f32.mrf.mxu0
        %338 = vdwg.mxu0
        %vm339 = vcmask 64512
        %v341 = vsel %vm339, %v261, 0
        %343 = vmatprep.subr.mxu0 0.0
        %344 = vmatpush1.msra.mxu0 0.0
        %345 = vmatprep.subr.mxu0 0.0
        %346 = vmatpush1.msra.mxu0 0.0
        %347 = vmatprep.subr.mxu0 0.0
        %348 = vmatpush1.msra.mxu0 0.0
        %349 = vmatprep.subr.mxu0 0.0
        %350 = vmatpush1.msra.mxu0 0.0
        %351 = vmatprep.subr.mxu0 0.0
        %352 = vmatpush1.msra.mxu0 0.0
        %353 = vmatprep.subr.mxu0 0.0
        %354 = vmatpush1.msra.mxu0 0.0
        %355 = vmatprep.subr.mxu0 0.0
        %356 = vmatpush1.msra.mxu0 0.0
        %357 = vmatprep.subr.mxu0 0.0
        %358 = vmatpush1.msra.mxu0 0.0
        %359 = vmatprep.subr.mxu0 0.0
        %360 = vmatpush1.msra.mxu0 0.0
        %361 = vmatprep.subr.mxu0 0.0
        %362 = vmatpush1.msra.mxu0 0.0
        %363 = vmatprep.subr.mxu0 0.0
        %364 = vmatpush1.msra.mxu0 0.0
        %365 = vmatprep.subr.mxu0 0.0
        %366 = vmatpush1.msra.mxu0 0.0
        %367 = vmatprep.subr.mxu0 0.0
        %368 = vmatpush1.msra.mxu0 0.0
        %369 = vmatprep.subr.mxu0 0.0
        %370 = vmatpush1.msra.mxu0 0.0
        %371 = vmatprep.subr.mxu0 0.0
        %372 = vmatpush1.msra.mxu0 0.0
        %373 = vmatprep.subr.mxu0 0.0
        %374 = vmatpush1.msra.mxu0 %v237
        %375 = vmatprep.subr.mxu0 0.0
        %376 = vmatpush2.msra.mxu0 0.0
        %377 = vmatprep.subr.mxu0 0.0
        %378 = vmatpush2.msra.mxu0 0.0
        %379 = vmatprep.subr.mxu0 0.0
        %380 = vmatpush2.msra.mxu0 0.0
        %381 = vmatprep.subr.mxu0 0.0
        %382 = vmatpush2.msra.mxu0 0.0
        %383 = vmatprep.subr.mxu0 0.0
        %384 = vmatpush2.msra.mxu0 0.0
        %385 = vmatprep.subr.mxu0 0.0
        %386 = vmatpush2.msra.mxu0 0.0
        %387 = vmatprep.subr.mxu0 0.0
        %388 = vmatpush2.msra.mxu0 0.0
        %389 = vmatprep.subr.mxu0 0.0
        %390 = vmatpush2.msra.mxu0 0.0
        %391 = vmatprep.subr.mxu0 0.0
        %392 = vmatpush2.msra.mxu0 0.0
        %393 = vmatprep.subr.mxu0 0.0
        %394 = vmatpush2.msra.mxu0 0.0
        %395 = vmatprep.subr.mxu0 0.0
        %396 = vmatpush2.msra.mxu0 0.0
        %397 = vmatprep.subr.mxu0 0.0
        %398 = vmatpush2.msra.mxu0 0.0
        %399 = vmatprep.subr.mxu0 0.0
        %400 = vmatpush2.msra.mxu0 0.0
        %401 = vmatprep.subr.mxu0 0.0
        %402 = vmatpush2.msra.mxu0 0.0
        %403 = vmatprep.subr.mxu0 0.0
        %404 = vmatpush2.msra.mxu0 0.0
        %405 = vmatprep.subr.mxu0 0.0
        %406 = vmatpush2.msra.mxu0 0.0
        %407 = vmatprep.mubr.f32.mxu0 0.0
        %408 = vmatmul.mubr.f32.gmra.mxu0 %v341
        %v409 = vpop.f32.mrf.mxu0
        %v410 = vadd.f32 %v336, %v409
        %v411 = vpop.f32.mrf.mxu0
        %412 = vdwg.mxu0
        %413 = vadd.xlane.f32.xlu0 %v410
        %v414 = vpop.xlane.xlu0 %413
        %v415 = vmul.f32 %v414, 0.03125
        %v416 = vsub.f32 %v410, %v415
        %v417 = vmul.f32 %v416, %v416
        %418 = vadd.xlane.f32.xlu0 %v417
        %v419 = vpop.xlane.xlu0 %418
        %v420 = vmul.f32 %v415, %v415
        %v421 = vmul.f32 %v420, 96.0
        %v422 = vsub.f32 %v419, %v421
        %v423 = vmul.f32 %v422, 0.03125
        %v424 = vmax.f32 %v423, 0.0
        %v425 = vld [vmem:[%s218] sm:$0xff]
        %v426 = vadd.f32 %v424, 1e-05
        %v427 = vrsqrt.pop %v426
        %v428 = vmul.f32 %v425, %v427
        %s429 = scalar_lea.vmem %s218, 8
        %v430 = vld [vmem:[%s429] sm:$0xff]
        %v431 = vmul.f32 %v428, %v415
        %v432 = vsub.f32 %v430, %v431
        %434 = vset.pattern.permute.xlu0 0
        %435 = vperm.xlu0 %434, %v428
        %v436 = vpop.permute.xlu0 %435
        %v438 = vmul.f32 %v410, %v436
        %440 = vset.pattern.permute.xlu0 0
        %441 = vperm.xlu0 %440, %v432
        %v442 = vpop.permute.xlu0 %441
        %v444 = vadd.f32 %v438, %v442
        %v445 = vmax.f32 %v444, 0.0
        %s446 = scalar_lea.vmem %s4, 1
        %v447 = vld [vmem:[%s446] sm:$0x1]
        %v449 = vlaneseq
        %v450 = vshrl.u32 %v449, 7
        %v451 = vsub.s32 0, %v450
        %v452 = vrot.slane %v447, %v451
        %v454 = vmul.f32 %v445, %v452
        %455 = vst [vmem:[#allocation4] sm:$0xff] %v454
        // Predicated region
        $region45: #{tpu_custom_call.1} parent=35 // pred_check
          %p456 = pneg %p129
        $region46: #{tpu_custom_call.1} parent=35 // pred_check_branch
          %458 = sbr.rel (%p456) target = $region48
        $region47: #{tpu_custom_call.1} parent=35 // pred_region
          %s460 = ssub.s32 128, 128
          %461 = vsyncadd [#allocation5], %s460
          %s463 = sshll.u32 [#allocation4], 4
          %s464 = int_to_ptr.vmem [resolvable:$true] %s463
          %466 = dma.vmem_to_hbm [thread:$0]  %s464, 128, %s5, [#allocation5]
        $region48: #{tpu_custom_call.1} parent=35 // pred_fallthru
          _
        // Predicated region
        $region49: #{tpu_custom_call.1} parent=35 // pred_check
          %p467 = pneg %p129
        $region50: #{tpu_custom_call.1} parent=35 // pred_check_branch
          %469 = sbr.rel (%p467) target = $region52
        $region51: #{tpu_custom_call.1} parent=35 // pred_region
          %470 = dma.done [#allocation5], 128
        $region52: #{tpu_custom_call.1} parent=35 // pred_fallthru
          _
      $region36: #{tpu_custom_call.1} parent=5 // pred_fallthru
        _
      %p471 = scmp.le.s32.totalorder 2, %s12
      // Predicated region
      $region53: #{tpu_custom_call.1} parent=5 // pred_check
        %p472 = pneg %p471
      $region54: #{tpu_custom_call.1} parent=5 // pred_check_branch
        %474 = sbr.rel (%p472) target = $region56
      $region55: #{tpu_custom_call.1} parent=5 // pred_region
        %s475 = ssub.s32 %s12, 2
      $region56: #{tpu_custom_call.1} parent=5 // pred_fallthru
        _
    $region6: #{tpu_custom_call.1} parent=1 // loop_footer
      %s16 = sadd.s32 1, %s12
    $region7: #{tpu_custom_call.1} parent=1 // loop_footer_branch
      %11 = sbr.rel target = $region3
    $region8: #{tpu_custom_call.1} parent=1 // loop_exit
      _
    %476 = vsyncpa [#allocation5], 1
    %s477 = scalar_lea.sflag [#allocation5], 1
    %478 = vsyncpa %s477, 1
  %479 = vsyncmov [#allocation3]
  %s480 = vpop.sfrf %479
  %p481 = scmp.eq.s32.totalorder %s480, 0
  %p482 = pneg %p481
  %484 = shalt.err (%p482)

</llo_original>
